<compile_context>
chip_gen: v5e
topology: v5e:2x2
jax: 0.10.0
libtpu: 0.0.40
codegen_flags: <defaults>
</compile_context>

<pallas_src>
import math

import jax
import jax.numpy as jnp
import numpy as np
from jax import lax
from jax.experimental import pallas as pl
from jax.experimental.pallas import tpu as pltpu


def _cross_attention_kernel(heads, dim_head):
    def kernel(x_ref, ctx_ref, wq_ref, wk_ref, wv_ref, wo_ref, bo_ref,
               o_ref, attn_ref):
        x = x_ref[0]      # (tq, Dq)  -- native dtype, no upcast
        ctx = ctx_ref[0]  # (Nk, Dc)
        in_dtype = x.dtype

        # Full-width projections (one MXU matmul each, N = heads*dim_head),
        # f32 accumulate, then drop activations back to the input dtype so the
        # attention matmuls feed the MXU bf16 operands when inputs are bf16.
        # Note: the 1/sqrt(dim_head) scale is pre-folded into wq.
        q = jnp.dot(x, wq_ref[...],
                    preferred_element_type=jnp.float32).astype(in_dtype)    # (tq, inner)
        k = jnp.dot(ctx, wk_ref[...],
                    preferred_element_type=jnp.float32).astype(in_dtype)    # (Nk, inner)
        v = jnp.dot(ctx, wv_ref[...],
                    preferred_element_type=jnp.float32).astype(in_dtype)    # (Nk, inner)

        # Per-head attention via static lane slices; results written into one
        # (tq, inner) VMEM slab so the output projection is a single matmul.
        for h in range(heads):
            lo = h * dim_head
            qh = q[:, lo:lo + dim_head]   # (tq, dh)
            kh = k[:, lo:lo + dim_head]   # (Nk, dh)
            vh = v[:, lo:lo + dim_head]   # (Nk, dh)

            # q @ k^T without materializing a transpose (contract last dims).
            s = lax.dot_general(qh, kh, (((1,), (1,)), ((), ())),
                                preferred_element_type=jnp.float32)          # (tq, Nk)
            m = jnp.max(s, axis=-1, keepdims=True)
            p = jnp.exp(s - m)
            p = p / jnp.sum(p, axis=-1, keepdims=True)   # exact denominator (f32)

            attn_ref[:, lo:lo + dim_head] = jnp.dot(
                p.astype(vh.dtype), vh,
                preferred_element_type=jnp.float32).astype(attn_ref.dtype)   # (tq, dh)

        # Output projection: one (tq, inner) @ (inner, Dq) matmul + bias.
        out = jnp.dot(attn_ref[...], wo_ref[...],
                      preferred_element_type=jnp.float32)                    # (tq, Dq)
        o_ref[0] = (out + bo_ref[...].astype(jnp.float32)).astype(o_ref.dtype)

    return kernel


def _vmem_capacity_bytes():
    try:
        cap = int(pltpu.get_tpu_info().vmem_capacity_bytes)
        if cap > 0:
            return cap
    except Exception:
        pass
    return 0


def _vmem_limit_bytes():
    cap = _vmem_capacity_bytes()
    if cap:
        return (cap * 3) // 4          # leave headroom for compiler scratch
    return 64 * 1024 * 1024


def _pick_q_tile(nq):
    cap = _vmem_capacity_bytes()
    # Smaller q tiles on v7x (64 MiB VMEM); bigger on v5e/v6e (128 MiB).
    target = 512 if (cap and cap <= 64 * 1024 * 1024) else 1024
    if nq <= target:
        return nq
    for t in (target, 1024, 512, 256, 128, 64, 32, 16, 8):
        if t <= nq and nq % t == 0:
            return t
    return nq


def cross_attention(x, context, params, *, heads, dim_head):
    """x: (B, Nq, Dq), context: (B, Nk, Dc). Returns (B, Nq, Dq)."""
    B, Nq, Dq = x.shape
    _, Nk, Dc = context.shape
    inner = heads * dim_head
    scale = 1.0 / math.sqrt(dim_head)

    # torch.nn.Linear stores W as (out, in); y = x @ W.T -> feed W.T slabs.
    # Fold the attention scale into Wq once, outside the hot path.
    wq_t = (params["wq"].T * scale).astype(params["wq"].dtype)   # (Dq, inner)
    wk_t = params["wk"].T                                        # (Dc, inner)
    wv_t = params["wv"].T                                        # (Dc, inner)
    wo_t = params["wo"].T                                        # (inner, Dq)
    bo2 = params["bo"].reshape(1, Dq)

    tq = _pick_q_tile(Nq)
    kernel = _cross_attention_kernel(heads, dim_head)

    grid_spec = pltpu.PrefetchScalarGridSpec(
        num_scalar_prefetch=0,
        grid=(B, Nq // tq),
        in_specs=[
            pl.BlockSpec((1, tq, Dq), lambda b, qi: (b, qi, 0)),    # x tile
            pl.BlockSpec((1, Nk, Dc), lambda b, qi: (b, 0, 0)),     # context
            # Constant block indices -> weights stay resident in VMEM.
            pl.BlockSpec((Dq, inner), lambda b, qi: (0, 0)),        # wq.T (pre-scaled)
            pl.BlockSpec((Dc, inner), lambda b, qi: (0, 0)),        # wk.T
            pl.BlockSpec((Dc, inner), lambda b, qi: (0, 0)),        # wv.T
            pl.BlockSpec((inner, Dq), lambda b, qi: (0, 0)),        # wo.T
            pl.BlockSpec((1, Dq), lambda b, qi: (0, 0)),            # bias
        ],
        out_specs=pl.BlockSpec((1, tq, Dq), lambda b, qi: (b, qi, 0)),
        # Per-head attn slab in the input dtype (bf16 in production).
        scratch_shapes=[pltpu.VMEM((tq, inner), x.dtype)],
    )

    return pl.pallas_call(
        kernel,
        out_shape=jax.ShapeDtypeStruct((B, Nq, Dq), x.dtype),
        grid_spec=grid_spec,
        compiler_params=pltpu.CompilerParams(
            dimension_semantics=("parallel", "parallel"),
            vmem_limit_bytes=_vmem_limit_bytes(),
        ),
    )(x, context, wq_t, wk_t, wv_t, wo_t, bo2)


def cross_attention_ref(x, context, params, *, heads, dim_head):
    """Pure-JAX reference matching the PyTorch forward (dropout=0, eval)."""
    B, Nq, Dq = x.shape
    _, Nk, Dc = context.shape
    q = x @ params["wq"].T                       # (B, Nq, inner)
    k = context @ params["wk"].T                 # (B, Nk, inner)
    v = context @ params["wv"].T                 # (B, Nk, inner)

    def split(t):
        b, s, _ = t.shape
        return t.reshape(b, s, heads, dim_head).transpose(0, 2, 1, 3)

    qh, kh, vh = split(q), split(k), split(v)
    s = jnp.einsum("bhqd,bhkd->bhqk", qh, kh) / math.sqrt(dim_head)
    p = jax.nn.softmax(s, axis=-1)
    o = jnp.einsum("bhqk,bhkd->bhqd", p, vh)
    o = o.transpose(0, 2, 1, 3).reshape(B, Nq, heads * dim_head)
    return o @ params["wo"].T + params["bo"]


if __name__ == "__main__":
    # Small shapes consistent with the module's forward.
    B, Nq, Nk = 2, 8, 8
    query_dim, context_dim = 32, 32
    heads, dim_head = 2, 16
    inner = heads * dim_head

    key = jax.random.PRNGKey(0)
    kx, kc, k1, k2, k3, k4, k5 = jax.random.split(key, 7)

    x = jax.random.normal(kx, (B, Nq, query_dim), dtype=jnp.float32)
    context = jax.random.normal(kc, (B, Nk, context_dim), dtype=jnp.float32)

    # Deterministic synthetic parameters (torch.nn.Linear stores W as (out, in)).
    params = {
        "wq": 0.1 * jax.random.normal(k1, (inner, query_dim), dtype=jnp.float32),
        "wk": 0.1 * jax.random.normal(k2, (inner, context_dim), dtype=jnp.float32),
        "wv": 0.1 * jax.random.normal(k3, (inner, context_dim), dtype=jnp.float32),
        "wo": 0.1 * jax.random.normal(k4, (query_dim, inner), dtype=jnp.float32),
        "bo": 0.1 * jax.random.normal(k5, (query_dim,), dtype=jnp.float32),
    }

    out = cross_attention(x, context, params, heads=heads, dim_head=dim_head)
    out = jax.block_until_ready(out)

    ref = cross_attention_ref(x, context, params, heads=heads, dim_head=dim_head)
    np.testing.assert_allclose(np.asarray(out), np.asarray(ref), atol=2e-4, rtol=2e-4)

    print("KERNEL_OK")
</pallas_src>

<mosaic_0001>
module attributes {stable_mosaic.version = 11 : i64} {
  func.func @kernel(%arg0: i32, %arg1: i32, %arg2: memref<1x8x32xf32, #tpu.memory_space<vmem>>, %arg3: memref<1x8x32xf32, #tpu.memory_space<vmem>>, %arg4: memref<32x32xf32, #tpu.memory_space<vmem>>, %arg5: memref<32x32xf32, #tpu.memory_space<vmem>>, %arg6: memref<32x32xf32, #tpu.memory_space<vmem>>, %arg7: memref<32x32xf32, #tpu.memory_space<vmem>>, %arg8: memref<1x32xf32, #tpu.memory_space<vmem>>, %arg9: memref<1x8x32xf32, #tpu.memory_space<vmem>>, %arg10: memref<8x32xf32, #tpu.memory_space<vmem>>) attributes {dimension_semantics = [#tpu.dimension_semantics<parallel>, #tpu.dimension_semantics<parallel>], iteration_bounds = array<i64: 2, 1>, scalar_prefetch = 0 : i64, scratch_operands = 1 : i64, tpu.core_type = #tpu.core_type<tc>, window_params = [{transform_indices = @transform_0, window_bounds = array<i64: 1, 8, 32>}, {transform_indices = @transform_1, window_bounds = array<i64: 1, 8, 32>}, {pipeline_mode = #tpu.pipeline_mode<synchronous>, transform_indices = @transform_2, window_bounds = array<i64: 32, 32>}, {pipeline_mode = #tpu.pipeline_mode<synchronous>, transform_indices = @transform_3, window_bounds = array<i64: 32, 32>}, {pipeline_mode = #tpu.pipeline_mode<synchronous>, transform_indices = @transform_4, window_bounds = array<i64: 32, 32>}, {pipeline_mode = #tpu.pipeline_mode<synchronous>, transform_indices = @transform_5, window_bounds = array<i64: 32, 32>}, {pipeline_mode = #tpu.pipeline_mode<synchronous>, transform_indices = @transform_6, window_bounds = array<i64: 1, 32>}, {transform_indices = @transform_7, window_bounds = array<i64: 1, 8, 32>}]} {
    %c0 = arith.constant 0 : index
    %c0_0 = arith.constant 0 : index
    %c0_1 = arith.constant 0 : index
    %0 = vector.load %arg2[%c0, %c0_0, %c0_1] : memref<1x8x32xf32, #tpu.memory_space<vmem>>, vector<1x8x32xf32>
    %1 = vector.shape_cast %0 : vector<1x8x32xf32> to vector<8x32xf32>
    %c0_2 = arith.constant 0 : index
    %c0_3 = arith.constant 0 : index
    %c0_4 = arith.constant 0 : index
    %2 = vector.load %arg3[%c0_2, %c0_3, %c0_4] : memref<1x8x32xf32, #tpu.memory_space<vmem>>, vector<1x8x32xf32>
    %3 = vector.shape_cast %2 : vector<1x8x32xf32> to vector<8x32xf32>
    %c0_5 = arith.constant 0 : index
    %c0_6 = arith.constant 0 : index
    %4 = vector.load %arg4[%c0_5, %c0_6] : memref<32x32xf32, #tpu.memory_space<vmem>>, vector<32x32xf32>
    %cst = arith.constant dense<0.000000e+00> : vector<8x32xf32>
    %5 = tpu.matmul %1, %4, %cst {dimension_numbers = #tpu.dot_dimension_numbers<[1], [0], [0], [1], [0, 0, 1, 1], [], []>} : vector<8x32xf32>, vector<32x32xf32>, vector<8x32xf32> -> vector<8x32xf32>
    %c0_7 = arith.constant 0 : index
    %c0_8 = arith.constant 0 : index
    %6 = vector.load %arg5[%c0_7, %c0_8] : memref<32x32xf32, #tpu.memory_space<vmem>>, vector<32x32xf32>
    %cst_9 = arith.constant dense<0.000000e+00> : vector<8x32xf32>
    %7 = tpu.matmul %3, %6, %cst_9 {dimension_numbers = #tpu.dot_dimension_numbers<[1], [0], [0], [1], [0, 0, 1, 1], [], []>} : vector<8x32xf32>, vector<32x32xf32>, vector<8x32xf32> -> vector<8x32xf32>
    %c0_10 = arith.constant 0 : index
    %c0_11 = arith.constant 0 : index
    %8 = vector.load %arg6[%c0_10, %c0_11] : memref<32x32xf32, #tpu.memory_space<vmem>>, vector<32x32xf32>
    %cst_12 = arith.constant dense<0.000000e+00> : vector<8x32xf32>
    %9 = tpu.matmul %3, %8, %cst_12 {dimension_numbers = #tpu.dot_dimension_numbers<[1], [0], [0], [1], [0, 0, 1, 1], [], []>} : vector<8x32xf32>, vector<32x32xf32>, vector<8x32xf32> -> vector<8x32xf32>
    %10 = vector.extract_strided_slice %5 {offsets = [0, 0], sizes = [8, 16], strides = [1, 1]} : vector<8x32xf32> to vector<8x16xf32>
    %11 = vector.extract_strided_slice %7 {offsets = [0, 0], sizes = [8, 16], strides = [1, 1]} : vector<8x32xf32> to vector<8x16xf32>
    %12 = vector.extract_strided_slice %9 {offsets = [0, 0], sizes = [8, 16], strides = [1, 1]} : vector<8x32xf32> to vector<8x16xf32>
    %cst_13 = arith.constant dense<0.000000e+00> : vector<8x8xf32>
    %13 = tpu.matmul %10, %11, %cst_13 {dimension_numbers = #tpu.dot_dimension_numbers<[1], [1], [0], [0], [0, 0, 1, 0], [], []>} : vector<8x16xf32>, vector<8x16xf32>, vector<8x8xf32> -> vector<8x8xf32>
    %cst_14 = arith.constant dense<0xFF800000> : vector<8xf32>
    %14 = vector.multi_reduction <maximumf>, %13, %cst_14 [1] : vector<8x8xf32> to vector<8xf32>
    %15 = vector.shape_cast %14 : vector<8xf32> to vector<8x1xf32>
    %16 = vector.broadcast %15 : vector<8x1xf32> to vector<8x8xf32>
    %17 = arith.subf %13, %16 : vector<8x8xf32>
    %18 = math.exp %17 : vector<8x8xf32>
    %cst_15 = arith.constant dense<0.000000e+00> : vector<8xf32>
    %19 = vector.multi_reduction <add>, %18, %cst_15 [1] : vector<8x8xf32> to vector<8xf32>
    %20 = vector.shape_cast %19 : vector<8xf32> to vector<8x1xf32>
    %21 = vector.broadcast %20 : vector<8x1xf32> to vector<8x8xf32>
    %22 = arith.divf %18, %21 : vector<8x8xf32>
    %cst_16 = arith.constant dense<0.000000e+00> : vector<8x16xf32>
    %23 = tpu.matmul %22, %12, %cst_16 {dimension_numbers = #tpu.dot_dimension_numbers<[1], [0], [0], [1], [0, 0, 1, 1], [], []>} : vector<8x8xf32>, vector<8x16xf32>, vector<8x16xf32> -> vector<8x16xf32>
    %c0_17 = arith.constant 0 : index
    %c0_18 = arith.constant 0 : index
    %24 = vector.load %arg10[%c0_17, %c0_18] : memref<8x32xf32, #tpu.memory_space<vmem>>, vector<8x16xf32>
    tpu.vector_store %arg10[%c0_17, %c0_18], %23 {strides = array<i32>} : memref<8x32xf32, #tpu.memory_space<vmem>>, vector<8x16xf32>,
    %25 = vector.extract_strided_slice %5 {offsets = [0, 16], sizes = [8, 16], strides = [1, 1]} : vector<8x32xf32> to vector<8x16xf32>
    %26 = vector.extract_strided_slice %7 {offsets = [0, 16], sizes = [8, 16], strides = [1, 1]} : vector<8x32xf32> to vector<8x16xf32>
    %27 = vector.extract_strided_slice %9 {offsets = [0, 16], sizes = [8, 16], strides = [1, 1]} : vector<8x32xf32> to vector<8x16xf32>
    %cst_19 = arith.constant dense<0.000000e+00> : vector<8x8xf32>
    %28 = tpu.matmul %25, %26, %cst_19 {dimension_numbers = #tpu.dot_dimension_numbers<[1], [1], [0], [0], [0, 0, 1, 0], [], []>} : vector<8x16xf32>, vector<8x16xf32>, vector<8x8xf32> -> vector<8x8xf32>
    %cst_20 = arith.constant dense<0xFF800000> : vector<8xf32>
    %29 = vector.multi_reduction <maximumf>, %28, %cst_20 [1] : vector<8x8xf32> to vector<8xf32>
    %30 = vector.shape_cast %29 : vector<8xf32> to vector<8x1xf32>
    %31 = vector.broadcast %30 : vector<8x1xf32> to vector<8x8xf32>
    %32 = arith.subf %28, %31 : vector<8x8xf32>
    %33 = math.exp %32 : vector<8x8xf32>
    %cst_21 = arith.constant dense<0.000000e+00> : vector<8xf32>
    %34 = vector.multi_reduction <add>, %33, %cst_21 [1] : vector<8x8xf32> to vector<8xf32>
    %35 = vector.shape_cast %34 : vector<8xf32> to vector<8x1xf32>
    %36 = vector.broadcast %35 : vector<8x1xf32> to vector<8x8xf32>
    %37 = arith.divf %33, %36 : vector<8x8xf32>
    %cst_22 = arith.constant dense<0.000000e+00> : vector<8x16xf32>
    %38 = tpu.matmul %37, %27, %cst_22 {dimension_numbers = #tpu.dot_dimension_numbers<[1], [0], [0], [1], [0, 0, 1, 1], [], []>} : vector<8x8xf32>, vector<8x16xf32>, vector<8x16xf32> -> vector<8x16xf32>
    %c0_23 = arith.constant 0 : index
    %c16 = arith.constant 16 : index
    %39 = vector.load %arg10[%c0_23, %c16] : memref<8x32xf32, #tpu.memory_space<vmem>>, vector<8x16xf32>
    tpu.vector_store %arg10[%c0_23, %c16], %38 {strides = array<i32>} : memref<8x32xf32, #tpu.memory_space<vmem>>, vector<8x16xf32>,
    %c0_24 = arith.constant 0 : index
    %c0_25 = arith.constant 0 : index
    %40 = vector.load %arg10[%c0_24, %c0_25] : memref<8x32xf32, #tpu.memory_space<vmem>>, vector<8x32xf32>
    %c0_26 = arith.constant 0 : index
    %c0_27 = arith.constant 0 : index
    %41 = vector.load %arg7[%c0_26, %c0_27] : memref<32x32xf32, #tpu.memory_space<vmem>>, vector<32x32xf32>
    %cst_28 = arith.constant dense<0.000000e+00> : vector<8x32xf32>
    %42 = tpu.matmul %40, %41, %cst_28 {dimension_numbers = #tpu.dot_dimension_numbers<[1], [0], [0], [1], [0, 0, 1, 1], [], []>} : vector<8x32xf32>, vector<32x32xf32>, vector<8x32xf32> -> vector<8x32xf32>
    %c0_29 = arith.constant 0 : index
    %c0_30 = arith.constant 0 : index
    %43 = vector.load %arg8[%c0_29, %c0_30] : memref<1x32xf32, #tpu.memory_space<vmem>>, vector<1x32xf32>
    %44 = vector.broadcast %43 : vector<1x32xf32> to vector<8x32xf32>
    %45 = arith.addf %42, %44 : vector<8x32xf32>
    %c0_31 = arith.constant 0 : index
    %c0_32 = arith.constant 0 : index
    %c0_33 = arith.constant 0 : index
    %46 = vector.load %arg9[%c0_31, %c0_32, %c0_33] : memref<1x8x32xf32, #tpu.memory_space<vmem>>, vector<1x8x32xf32>
    %47 = vector.shape_cast %46 : vector<1x8x32xf32> to vector<8x32xf32>
    %48 = vector.shape_cast %45 : vector<8x32xf32> to vector<1x8x32xf32>
    tpu.vector_store %arg9[%c0_31, %c0_32, %c0_33], %48 {strides = array<i32>} : memref<1x8x32xf32, #tpu.memory_space<vmem>>, vector<1x8x32xf32>,
    return
  }
  func.func @transform_0(%arg0: i32, %arg1: i32) -> (i32, i32, i32) {
    %c0_i32 = arith.constant 0 : i32
    %c0_i32_0 = arith.constant 0 : i32
    return %arg0, %arg1, %c0_i32 : i32, i32, i32
  }
  func.func @transform_1(%arg0: i32, %arg1: i32) -> (i32, i32, i32) {
    %c0_i32 = arith.constant 0 : i32
    %c0_i32_0 = arith.constant 0 : i32
    %c0_i32_1 = arith.constant 0 : i32
    return %arg0, %c0_i32, %c0_i32_0 : i32, i32, i32
  }
  func.func @transform_2(%arg0: i32, %arg1: i32) -> (i32, i32) {
    %c0_i32 = arith.constant 0 : i32
    %c0_i32_0 = arith.constant 0 : i32
    %c0_i32_1 = arith.constant 0 : i32
    return %c0_i32, %c0_i32_0 : i32, i32
  }
  func.func @transform_3(%arg0: i32, %arg1: i32) -> (i32, i32) {
    %c0_i32 = arith.constant 0 : i32
    %c0_i32_0 = arith.constant 0 : i32
    %c0_i32_1 = arith.constant 0 : i32
    return %c0_i32, %c0_i32_0 : i32, i32
  }
  func.func @transform_4(%arg0: i32, %arg1: i32) -> (i32, i32) {
    %c0_i32 = arith.constant 0 : i32
    %c0_i32_0 = arith.constant 0 : i32
    %c0_i32_1 = arith.constant 0 : i32
    return %c0_i32, %c0_i32_0 : i32, i32
  }
  func.func @transform_5(%arg0: i32, %arg1: i32) -> (i32, i32) {
    %c0_i32 = arith.constant 0 : i32
    %c0_i32_0 = arith.constant 0 : i32
    %c0_i32_1 = arith.constant 0 : i32
    return %c0_i32, %c0_i32_0 : i32, i32
  }
  func.func @transform_6(%arg0: i32, %arg1: i32) -> (i32, i32) {
    %c0_i32 = arith.constant 0 : i32
    %c0_i32_0 = arith.constant 0 : i32
    %c0_i32_1 = arith.constant 0 : i32
    return %c0_i32, %c0_i32_0 : i32, i32
  }
  func.func @transform_7(%arg0: i32, %arg1: i32) -> (i32, i32, i32) {
    %c0_i32 = arith.constant 0 : i32
    %c0_i32_0 = arith.constant 0 : i32
    return %arg0, %arg1, %c0_i32 : i32, i32, i32
  }
}

</mosaic_0001>

<llo_original>
// kernel: tpu_custom_call.1
$region0: #{tpu_custom_call.1}
  #allocation0 [shape = 'u32[]', space=smem, size = 0x4, offset = 0x4, fixed_abs, tag = 'smem constant byte address 0x4 - core index']
  #allocation1 [shape = 'u32[72,128]{1,0:T(1,128)}', space=vmem, size = 0x9000, scoped, tag = 'internal scratch']
  #allocation2 [shape = 'f32[8,32]{1,0:T(8,128)}', space=vmem, size = 0x1000, scoped, tag = 'scratch operand']
  %s0 = inlined_call_operand.hbm [shape: f32[2,8,32], index: 0, kind: input, shape index: {}]
  %s1 = inlined_call_operand.hbm [shape: f32[2,8,32], index: 1, kind: input, shape index: {}]
  %s2 = inlined_call_operand.hbm [shape: f32[32,32], index: 2, kind: input, shape index: {}]
  %s3 = inlined_call_operand.hbm [shape: f32[32,32], index: 3, kind: input, shape index: {}]
  %s4 = inlined_call_operand.hbm [shape: f32[32,32], index: 4, kind: input, shape index: {}]
  %s5 = inlined_call_operand.hbm [shape: f32[32,32], index: 5, kind: input, shape index: {}]
  %s6 = inlined_call_operand.vmem [shape: f32[1,32], index: 6, kind: input, shape index: {}]
  %s7 = inlined_call_operand.hbm [shape: f32[2,8,32], index: 7, kind: output, shape index: {}]
  %s8 = sld [smem:[#allocation0]]
  $region85: #{tpu_custom_call.1} parent=0
    _
  %s10 = ssub.s32 1, %s8
  %s11 = scalar_select 0, %s10, %s8
  $region1: #{tpu_custom_call.1} parent=0
    #allocation3 [shape = 'u8[8192]{0}', space=vmem, size = 0x2000, scoped, tag = 'input window, operand 0']
    #allocation4 [shape = 's32[2]{0}', space=sflag, size = 0x8, scoped, tag = 'scoped memory for tpu_custom_call.1']
    #allocation5 [shape = 's32[2]{0}', space=sflag, size = 0x8, scoped, tag = 'scoped memory for tpu_custom_call.1']
    #allocation6 [shape = 'u8[8192]{0}', space=vmem, size = 0x2000, scoped, tag = 'input window, operand 1']
    #allocation7 [shape = 's32[2]{0}', space=sflag, size = 0x8, scoped, tag = 'scoped memory for tpu_custom_call.1']
    #allocation8 [shape = 'u8[16384]{0}', space=vmem, size = 0x4000, scoped, tag = 'input window, operand 2, single buffered']
    #allocation9 [shape = 'u8[16384]{0}', space=vmem, size = 0x4000, scoped, tag = 'input window, operand 3, single buffered']
    #allocation10 [shape = 's32[1]{0}', space=sflag, size = 0x4, scoped, tag = 'scoped memory for tpu_custom_call.1']
    #allocation11 [shape = 'u8[16384]{0}', space=vmem, size = 0x4000, scoped, tag = 'input window, operand 4, single buffered']
    #allocation12 [shape = 'u8[16384]{0}', space=vmem, size = 0x4000, scoped, tag = 'input window, operand 5, single buffered']
    #allocation13 [shape = 's32[1]{0}', space=sflag, size = 0x4, scoped, tag = 'scoped memory for tpu_custom_call.1']
    #allocation14 [shape = 'u8[8192]{0}', space=vmem, size = 0x2000, scoped, tag = 'output window, operand 0']
    %12 = vsyncpa [#allocation4], 0
    %s13 = scalar_lea.sflag [#allocation4], 1
    %14 = vsyncpa %s13, 0
    %15 = vsyncpa [#allocation7], 0
    %s16 = scalar_lea.sflag [#allocation7], 1
    %17 = vsyncpa %s16, 0
    %18 = vsyncpa [#allocation10], 0
    %19 = vsyncpa [#allocation13], 0
    %20 = vsyncpa [#allocation5], 0
    %s21 = scalar_lea.sflag [#allocation5], 1
    %22 = vsyncpa %s21, 0
    loop: start=0, step=1, limit=4
    $region2: #{tpu_custom_call.1} parent=1 // loop_pre_header
      _
    $region3: #{tpu_custom_call.1} parent=1 // loop_header
      %s24 = sphi 0, %s28
      %p25 = scmp.ge.s32.totalorder %s24, 4
      %s31 = sphi 0, %s43
      %s32 = sphi 0, %s39
      %s33 = sphi 0, %s31
      %s34 = sphi 0, %s32
      %s35 = sphi 0, %s33
      %s36 = sphi 0, %s34
      %s48 = sphi 0, %s50
      %s51 = sphi 0, %s48
      %s52 = sphi 0, %s51
      %s68 = sphi 0, %s52
      %s74 = sphi 0, %s76
      %s77 = sphi 0, %s74
      %s78 = sphi 0, %s77
      %s94 = sphi 0, %s78
      %s98 = sphi 0, %s98
      %s100 = sphi 0, %s98
      %s101 = sphi 0, %s100
      %s115 = sphi 0, %s101
      %s119 = sphi 0, %s119
      %s121 = sphi 0, %s119
      %s122 = sphi 0, %s121
      %s136 = sphi 0, %s122
      %s140 = sphi 0, %s140
      %s142 = sphi 0, %s140
      %s143 = sphi 0, %s142
      %s157 = sphi 0, %s143
      %s161 = sphi 0, %s161
      %s163 = sphi 0, %s161
      %s164 = sphi 0, %s163
      %s178 = sphi 0, %s164
      %s182 = sphi 0, %s182
      %s184 = sphi 0, %s182
      %s185 = sphi 0, %s184
      %s199 = sphi 0, %s185
      %s207 = sphi 0, %s209
      %s210 = sphi 0, %s207
      %s211 = sphi 0, %s210
      %s227 = sphi 0, %s211
    $region4: #{tpu_custom_call.1} parent=1 // loop_header_branch
      %27 = sbr.rel (%p25) target = $region8
    $region5: #{tpu_custom_call.1} parent=1 // loop_body
      %s29 = ssub.s32 %s24, 1
      %s30 = ssub.s32 %s24, 2
      %s37 = sadd.s32 1, %s32
      %p38 = scmp.ge.s32.totalorder %s37, 1
      %s39 = scalar_select %p38, 0, %s37
      %s40 = sadd.s32 1, %s31
      %s41 = scalar_select %p38, %s40, %s31
      %p42 = scmp.ge.s32.totalorder %s41, 2
      %s43 = scalar_select %p42, 0, %s41
      %s44 = ssub.s32 %s31, %s43
      %s45 = ssub.s32 %s32, %s39
      %s46 = sor.u32 %s44, %s45
      %p47 = scmp.eq.s32.totalorder %s46, 0
      %s49 = sadd.s32 %s48, 1
      %s50 = scalar_select %p47, %s48, %s49
      %p53 = pneg %p47
      %p54 = scmp.eq.s32.totalorder %s24, 1
      %p55 = por %p53, %p54
      %p56 = scmp.ne.s32.totalorder %s48, %s51
      %p57 = scmp.eq.s32.totalorder %s24, 0
      %p58 = por %p56, %p57
      %p59 = scmp.ne.s32.totalorder %s48, %s51
      %p60 = scmp.eq.s32.totalorder %s29, 1
      %p61 = por %p59, %p60
      %p62 = scmp.ne.s32.totalorder %s51, %s52
      %p63 = scmp.eq.s32.totalorder %s29, 0
      %p64 = por %p62, %p63
      %p65 = scmp.ne.s32.totalorder %s51, %s52
      %p66 = scmp.eq.s32.totalorder %s30, 1
      %p67 = por %p65, %p66
      %p69 = scmp.ne.s32.totalorder %s52, %s68
      %p70 = scmp.eq.s32.totalorder %s30, 0
      %p71 = por %p69, %p70
      %s72 = ssub.s32 %s31, %s43
      %p73 = scmp.eq.s32.totalorder %s72, 0
      %s75 = sadd.s32 %s74, 1
      %s76 = scalar_select %p73, %s74, %s75
      %p79 = pneg %p73
      %p80 = scmp.eq.s32.totalorder %s24, 1
      %p81 = por %p79, %p80
      %p82 = scmp.ne.s32.totalorder %s74, %s77
      %p83 = scmp.eq.s32.totalorder %s24, 0
      %p84 = por %p82, %p83
      %p85 = scmp.ne.s32.totalorder %s74, %s77
      %p86 = scmp.eq.s32.totalorder %s29, 1
      %p87 = por %p85, %p86
      %p88 = scmp.ne.s32.totalorder %s77, %s78
      %p89 = scmp.eq.s32.totalorder %s29, 0
      %p90 = por %p88, %p89
      %p91 = scmp.ne.s32.totalorder %s77, %s78
      %p92 = scmp.eq.s32.totalorder %s30, 1
      %p93 = por %p91, %p92
      %p95 = scmp.ne.s32.totalorder %s78, %s94
      %p96 = scmp.eq.s32.totalorder %s30, 0
      %p97 = por %p95, %p96
      %s99 = sadd.s32 %s98, 1
      %p102 = scmp.eq.s32.totalorder %s24, 1
      %p103 = scmp.ne.s32.totalorder %s98, %s100
      %p104 = scmp.eq.s32.totalorder %s24, 0
      %p105 = por %p103, %p104
      %p106 = scmp.ne.s32.totalorder %s98, %s100
      %p107 = scmp.eq.s32.totalorder %s29, 1
      %p108 = por %p106, %p107
      %p109 = scmp.ne.s32.totalorder %s100, %s101
      %p110 = scmp.eq.s32.totalorder %s29, 0
      %p111 = por %p109, %p110
      %p112 = scmp.ne.s32.totalorder %s100, %s101
      %p113 = scmp.eq.s32.totalorder %s30, 1
      %p114 = por %p112, %p113
      %p116 = scmp.ne.s32.totalorder %s101, %s115
      %p117 = scmp.eq.s32.totalorder %s30, 0
      %p118 = por %p116, %p117
      %s120 = sadd.s32 %s119, 1
      %p123 = scmp.eq.s32.totalorder %s24, 1
      %p124 = scmp.ne.s32.totalorder %s119, %s121
      %p125 = scmp.eq.s32.totalorder %s24, 0
      %p126 = por %p124, %p125
      %p127 = scmp.ne.s32.totalorder %s119, %s121
      %p128 = scmp.eq.s32.totalorder %s29, 1
      %p129 = por %p127, %p128
      %p130 = scmp.ne.s32.totalorder %s121, %s122
      %p131 = scmp.eq.s32.totalorder %s29, 0
      %p132 = por %p130, %p131
      %p133 = scmp.ne.s32.totalorder %s121, %s122
      %p134 = scmp.eq.s32.totalorder %s30, 1
      %p135 = por %p133, %p134
      %p137 = scmp.ne.s32.totalorder %s122, %s136
      %p138 = scmp.eq.s32.totalorder %s30, 0
      %p139 = por %p137, %p138
      %s141 = sadd.s32 %s140, 1
      %p144 = scmp.eq.s32.totalorder %s24, 1
      %p145 = scmp.ne.s32.totalorder %s140, %s142
      %p146 = scmp.eq.s32.totalorder %s24, 0
      %p147 = por %p145, %p146
      %p148 = scmp.ne.s32.totalorder %s140, %s142
      %p149 = scmp.eq.s32.totalorder %s29, 1
      %p150 = por %p148, %p149
      %p151 = scmp.ne.s32.totalorder %s142, %s143
      %p152 = scmp.eq.s32.totalorder %s29, 0
      %p153 = por %p151, %p152
      %p154 = scmp.ne.s32.totalorder %s142, %s143
      %p155 = scmp.eq.s32.totalorder %s30, 1
      %p156 = por %p154, %p155
      %p158 = scmp.ne.s32.totalorder %s143, %s157
      %p159 = scmp.eq.s32.totalorder %s30, 0
      %p160 = por %p158, %p159
      %s162 = sadd.s32 %s161, 1
      %p165 = scmp.eq.s32.totalorder %s24, 1
      %p166 = scmp.ne.s32.totalorder %s161, %s163
      %p167 = scmp.eq.s32.totalorder %s24, 0
      %p168 = por %p166, %p167
      %p169 = scmp.ne.s32.totalorder %s161, %s163
      %p170 = scmp.eq.s32.totalorder %s29, 1
      %p171 = por %p169, %p170
      %p172 = scmp.ne.s32.totalorder %s163, %s164
      %p173 = scmp.eq.s32.totalorder %s29, 0
      %p174 = por %p172, %p173
      %p175 = scmp.ne.s32.totalorder %s163, %s164
      %p176 = scmp.eq.s32.totalorder %s30, 1
      %p177 = por %p175, %p176
      %p179 = scmp.ne.s32.totalorder %s164, %s178
      %p180 = scmp.eq.s32.totalorder %s30, 0
      %p181 = por %p179, %p180
      %s183 = sadd.s32 %s182, 1
      %p186 = scmp.eq.s32.totalorder %s24, 1
      %p187 = scmp.ne.s32.totalorder %s182, %s184
      %p188 = scmp.eq.s32.totalorder %s24, 0
      %p189 = por %p187, %p188
      %p190 = scmp.ne.s32.totalorder %s182, %s184
      %p191 = scmp.eq.s32.totalorder %s29, 1
      %p192 = por %p190, %p191
      %p193 = scmp.ne.s32.totalorder %s184, %s185
      %p194 = scmp.eq.s32.totalorder %s29, 0
      %p195 = por %p193, %p194
      %p196 = scmp.ne.s32.totalorder %s184, %s185
      %p197 = scmp.eq.s32.totalorder %s30, 1
      %p198 = por %p196, %p197
      %p200 = scmp.ne.s32.totalorder %s185, %s199
      %p201 = scmp.eq.s32.totalorder %s30, 0
      %p202 = por %p200, %p201
      %s203 = ssub.s32 %s31, %s43
      %s204 = ssub.s32 %s32, %s39
      %s205 = sor.u32 %s203, %s204
      %p206 = scmp.eq.s32.totalorder %s205, 0
      %s208 = sadd.s32 %s207, 1
      %s209 = scalar_select %p206, %s207, %s208
      %p212 = pneg %p206
      %p213 = scmp.eq.s32.totalorder %s24, 1
      %p214 = por %p212, %p213
      %p215 = scmp.ne.s32.totalorder %s207, %s210
      %p216 = scmp.eq.s32.totalorder %s24, 0
      %p217 = por %p215, %p216
      %p218 = scmp.ne.s32.totalorder %s207, %s210
      %p219 = scmp.eq.s32.totalorder %s29, 1
      %p220 = por %p218, %p219
      %p221 = scmp.ne.s32.totalorder %s210, %s211
      %p222 = scmp.eq.s32.totalorder %s29, 0
      %p223 = por %p221, %p222
      %p224 = scmp.ne.s32.totalorder %s210, %s211
      %p225 = scmp.eq.s32.totalorder %s30, 1
      %p226 = por %p224, %p225
      %p228 = scmp.ne.s32.totalorder %s211, %s227
      %p229 = scmp.eq.s32.totalorder %s30, 0
      %p230 = por %p228, %p229
      %p231 = scmp.le.s32.totalorder 1, %s24
      %p232 = scmp.lt.s32.totalorder %s24, 3
      %p233 = pnand %p231, %p232
      %p234 = pneg %p233
      // Predicated region
      $region9: #{tpu_custom_call.1} parent=5 // pred_check
        _
      $region10: #{tpu_custom_call.1} parent=5 // pred_check_branch
        %236 = sbr.rel (%p233) target = $region12
      $region11: #{tpu_custom_call.1} parent=5 // pred_region
        %s237 = ssub.s32 %s24, 1
        // Predicated region
        $region13: #{tpu_custom_call.1} parent=11 // pred_check
          %p238 = pneg %p111
        $region14: #{tpu_custom_call.1} parent=11 // pred_check_branch
          %240 = sbr.rel (%p238) target = $region16
        $region15: #{tpu_custom_call.1} parent=11 // pred_region
          %242 = vsyncadd [#allocation7], 0
          %s243 = sshll.u32 %s2, 4
          %s244 = int_to_ptr.hbm [resolvable:$true] %s243
          %s245 = sshll.u32 [#allocation8], 4
          %s246 = int_to_ptr.vmem [resolvable:$true] %s245
          %251 = dma.hbm_to_vmem [thread:$0]  %s244, 512, %s246, [#allocation7], 128, 128, 8
        $region16: #{tpu_custom_call.1} parent=11 // pred_fallthru
          _
        // Predicated region
        $region17: #{tpu_custom_call.1} parent=11 // pred_check
          %p252 = pneg %p132
        $region18: #{tpu_custom_call.1} parent=11 // pred_check_branch
          %254 = sbr.rel (%p252) target = $region20
        $region19: #{tpu_custom_call.1} parent=11 // pred_region
          %256 = vsyncadd [#allocation10], 0
          %s257 = sshll.u32 %s3, 4
          %s258 = int_to_ptr.hbm [resolvable:$true] %s257
          %s259 = sshll.u32 [#allocation9], 4
          %s260 = int_to_ptr.vmem [resolvable:$true] %s259
          %265 = dma.hbm_to_vmem [thread:$0]  %s258, 512, %s260, [#allocation10], 128, 128, 8
        $region20: #{tpu_custom_call.1} parent=11 // pred_fallthru
          _
        // Predicated region
        $region21: #{tpu_custom_call.1} parent=11 // pred_check
          %p266 = pneg %p153
        $region22: #{tpu_custom_call.1} parent=11 // pred_check_branch
          %268 = sbr.rel (%p266) target = $region24
        $region23: #{tpu_custom_call.1} parent=11 // pred_region
          %270 = vsyncadd [#allocation10], 0
          %s271 = sshll.u32 %s4, 4
          %s272 = int_to_ptr.hbm [resolvable:$true] %s271
          %s273 = sshll.u32 [#allocation11], 4
          %s274 = int_to_ptr.vmem [resolvable:$true] %s273
          %279 = dma.hbm_to_vmem [thread:$0]  %s272, 512, %s274, [#allocation10], 128, 128, 8
        $region24: #{tpu_custom_call.1} parent=11 // pred_fallthru
          _
        // Predicated region
        $region25: #{tpu_custom_call.1} parent=11 // pred_check
          %p280 = pneg %p174
        $region26: #{tpu_custom_call.1} parent=11 // pred_check_branch
          %282 = sbr.rel (%p280) target = $region28
        $region27: #{tpu_custom_call.1} parent=11 // pred_region
          %284 = vsyncadd [#allocation13], 0
          %s285 = sshll.u32 %s5, 4
          %s286 = int_to_ptr.hbm [resolvable:$true] %s285
          %s287 = sshll.u32 [#allocation12], 4
          %s288 = int_to_ptr.vmem [resolvable:$true] %s287
          %293 = dma.hbm_to_vmem [thread:$0]  %s286, 512, %s288, [#allocation13], 128, 128, 8
        $region28: #{tpu_custom_call.1} parent=11 // pred_fallthru
          _
        // Predicated region
        $region29: #{tpu_custom_call.1} parent=11 // pred_check
          %p294 = pneg %p195
        $region30: #{tpu_custom_call.1} parent=11 // pred_check_branch
          %296 = sbr.rel (%p294) target = $region32
        $region31: #{tpu_custom_call.1} parent=11 // pred_region
          _
        $region32: #{tpu_custom_call.1} parent=11 // pred_fallthru
          _
      $region12: #{tpu_custom_call.1} parent=5 // pred_fallthru
        _
      %p297 = scmp.lt.s32.totalorder %s24, 2
      // Predicated region
      $region33: #{tpu_custom_call.1} parent=5 // pred_check
        %p298 = pneg %p297
      $region34: #{tpu_custom_call.1} parent=5 // pred_check_branch
        %300 = sbr.rel (%p298) target = $region36
      $region35: #{tpu_custom_call.1} parent=5 // pred_region
        // Predicated region
        $region37: #{tpu_custom_call.1} parent=35 // pred_check
          %p301 = pneg %p58
        $region38: #{tpu_custom_call.1} parent=35 // pred_check_branch
          %303 = sbr.rel (%p301) target = $region40
        $region39: #{tpu_custom_call.1} parent=35 // pred_region
          %s304 = sand.u32 %s48, 1
          %s305 = scalar_lea.sflag [#allocation4], %s304
          %s306 = sand.u32 %s48, 1
          %s307 = smul.addr %s306, 8
          %s308 = scalar_lea.vmem [#allocation3], %s307
          %310 = vsyncadd %s305, 0
          %s311 = sadd.s32 %s32, %s31
          %s312 = smul.addr %s311, 8
          %s313 = scalar_lea.hbm %s0, %s312
          %s315 = sshll.u32 %s313, 4
          %s316 = int_to_ptr.hbm [resolvable:$true] %s315
          %s317 = sshll.u32 %s308, 4
          %s318 = int_to_ptr.vmem [resolvable:$true] %s317
          %320 = dma.hbm_to_vmem [thread:$0]  %s316, 128, %s318, %s305
        $region40: #{tpu_custom_call.1} parent=35 // pred_fallthru
          _
        // Predicated region
        $region41: #{tpu_custom_call.1} parent=35 // pred_check
          %p321 = pneg %p84
        $region42: #{tpu_custom_call.1} parent=35 // pred_check_branch
          %323 = sbr.rel (%p321) target = $region44
        $region43: #{tpu_custom_call.1} parent=35 // pred_region
          %s324 = sand.u32 %s24, 1
          %s325 = scalar_lea.sflag [#allocation7], %s324
          %s326 = sand.u32 %s74, 1
          %s327 = smul.addr %s326, 8
          %s328 = scalar_lea.vmem [#allocation6], %s327
          %330 = vsyncadd %s325, 0
          %s331 = smul.addr %s31, 8
          %s332 = scalar_lea.hbm %s1, %s331
          %s334 = sshll.u32 %s332, 4
          %s335 = int_to_ptr.hbm [resolvable:$true] %s334
          %s336 = sshll.u32 %s328, 4
          %s337 = int_to_ptr.vmem [resolvable:$true] %s336
          %339 = dma.hbm_to_vmem [thread:$0]  %s335, 128, %s337, %s325
        $region44: #{tpu_custom_call.1} parent=35 // pred_fallthru
          _
      $region36: #{tpu_custom_call.1} parent=5 // pred_fallthru
        _
      %p340 = scmp.le.s32.totalorder 1, %s24
      %p341 = scmp.lt.s32.totalorder %s24, 3
      %p342 = pnand %p340, %p341
      %p343 = pneg %p342
      // Predicated region
      $region45: #{tpu_custom_call.1} parent=5 // pred_check
        _
      $region46: #{tpu_custom_call.1} parent=5 // pred_check_branch
        %345 = sbr.rel (%p342) target = $region48
      $region47: #{tpu_custom_call.1} parent=5 // pred_region
        %s346 = ssub.s32 %s24, 1
        %s347 = sand.u32 %s51, 1
        %s348 = scalar_lea.sflag [#allocation4], %s347
        %s349 = sand.u32 %s51, 1
        %s350 = smul.addr %s349, 8
        %s351 = scalar_lea.vmem [#allocation3], %s350
        // Predicated region
        $region49: #{tpu_custom_call.1} parent=47 // pred_check
          %p352 = pneg %p64
        $region50: #{tpu_custom_call.1} parent=47 // pred_check_branch
          %354 = sbr.rel (%p352) target = $region52
        $region51: #{tpu_custom_call.1} parent=47 // pred_region
          %356 = dma.done %s348, 128
        $region52: #{tpu_custom_call.1} parent=47 // pred_fallthru
          _
        %s357 = sand.u32 %s29, 1
        %s358 = scalar_lea.sflag [#allocation7], %s357
        %s359 = sand.u32 %s77, 1
        %s360 = smul.addr %s359, 8
        %s361 = scalar_lea.vmem [#allocation6], %s360
        // Predicated region
        $region53: #{tpu_custom_call.1} parent=47 // pred_check
          %p362 = pneg %p90
        $region54: #{tpu_custom_call.1} parent=47 // pred_check_branch
          %364 = sbr.rel (%p362) target = $region56
        $region55: #{tpu_custom_call.1} parent=47 // pred_region
          %366 = dma.done %s358, 128
        $region56: #{tpu_custom_call.1} parent=47 // pred_fallthru
          _
        // Predicated region
        $region57: #{tpu_custom_call.1} parent=47 // pred_check
          %p367 = pneg %p111
        $region58: #{tpu_custom_call.1} parent=47 // pred_check_branch
          %369 = sbr.rel (%p367) target = $region60
        $region59: #{tpu_custom_call.1} parent=47 // pred_region
          %371 = dma.done [#allocation7], 512
        $region60: #{tpu_custom_call.1} parent=47 // pred_fallthru
          _
        // Predicated region
        $region61: #{tpu_custom_call.1} parent=47 // pred_check
          %p372 = pneg %p132
        $region62: #{tpu_custom_call.1} parent=47 // pred_check_branch
          %374 = sbr.rel (%p372) target = $region64
        $region63: #{tpu_custom_call.1} parent=47 // pred_region
          %376 = dma.done [#allocation10], 512
        $region64: #{tpu_custom_call.1} parent=47 // pred_fallthru
          _
        // Predicated region
        $region65: #{tpu_custom_call.1} parent=47 // pred_check
          %p377 = pneg %p153
        $region66: #{tpu_custom_call.1} parent=47 // pred_check_branch
          %379 = sbr.rel (%p377) target = $region68
        $region67: #{tpu_custom_call.1} parent=47 // pred_region
          %381 = dma.done [#allocation10], 512
        $region68: #{tpu_custom_call.1} parent=47 // pred_fallthru
          _
        // Predicated region
        $region69: #{tpu_custom_call.1} parent=47 // pred_check
          %p382 = pneg %p174
        $region70: #{tpu_custom_call.1} parent=47 // pred_check_branch
          %384 = sbr.rel (%p382) target = $region72
        $region71: #{tpu_custom_call.1} parent=47 // pred_region
          %386 = dma.done [#allocation13], 512
        $region72: #{tpu_custom_call.1} parent=47 // pred_fallthru
          _
        %s387 = sand.u32 %s51, 1
        %s388 = scalar_lea.sflag [#allocation4], %s387
        %s389 = sand.u32 %s51, 1
        %s390 = smul.addr %s389, 8
        %s391 = scalar_lea.vmem [#allocation3], %s390
        %p392 = pneg %p64
        %p393 = pneg %p61
        %s394 = sand.u32 %s29, 1
        %s395 = scalar_lea.sflag [#allocation7], %s394
        %s396 = sand.u32 %s77, 1
        %s397 = smul.addr %s396, 8
        %s398 = scalar_lea.vmem [#allocation6], %s397
        %p399 = pneg %p90
        %p400 = pneg %p87
        %p401 = pneg %p111
        %p402 = pneg %p108
        %p403 = pneg %p132
        %p404 = pneg %p129
        %p405 = pneg %p153
        %p406 = pneg %p150
        %p407 = pneg %p174
        %p408 = pneg %p171
        %p409 = pneg %p195
        %p410 = pneg %p192
        %p411 = pneg %p223
        %p412 = pneg %p220
        %s413 = sand.u32 %s210, 1
        %s414 = scalar_lea.sflag [#allocation5], %s413
        %s415 = sand.u32 %s210, 1
        %s416 = smul.addr %s415, 8
        %s417 = scalar_lea.vmem [#allocation14], %s416
        %v418 = vld [vmem:[%s351] sm:$0xff]
        %v419 = vld [vmem:[%s361] sm:$0xff]
        %v420 = vld [vmem:[#allocation8] sm:$0xff]
        %v421 = vld [vmem:[#allocation8 + $0x8] sm:$0xff]
        %v422 = vld [vmem:[#allocation8 + $0x10] sm:$0xff]
        %v423 = vld [vmem:[#allocation8 + $0x18] sm:$0xff]
        %vm424 = vcmask 261120
        %v426 = vsel %vm424, %v418, 0
        %428 = vmatpush.msra.mxu0 0.0
        %429 = vmatpush.msra.mxu0 0.0
        %430 = vmatpush.msra.mxu0 0.0
        %431 = vmatpush.msra.mxu0 0.0
        %432 = vmatpush.msra.mxu0 0.0
        %433 = vmatpush.msra.mxu0 0.0
        %434 = vmatpush.msra.mxu0 0.0
        %435 = vmatpush.msra.mxu0 0.0
        %436 = vmatpush.msra.mxu0 0.0
        %437 = vmatpush.msra.mxu0 0.0
        %438 = vmatpush.msra.mxu0 0.0
        %439 = vmatpush.msra.mxu0 0.0
        %440 = vmatpush.msra.mxu0 %v423
        %441 = vmatpush.msra.mxu0 %v422
        %442 = vmatpush.msra.mxu0 %v421
        %443 = vmatpush.msra.mxu0 %v420
        %444 = vmatmul.f32.gmra.mxu0 %v426
        %v445 = vpop.f32.mrf.mxu0
        %v446 = vadd.f32 0.0, %v445
        %447 = vdwg.mxu0
        %v448 = vld [vmem:[#allocation9] sm:$0xff]
        %v449 = vld [vmem:[#allocation9 + $0x8] sm:$0xff]
        %v450 = vld [vmem:[#allocation9 + $0x10] sm:$0xff]
        %v451 = vld [vmem:[#allocation9 + $0x18] sm:$0xff]
        %v453 = vsel %vm424, %v419, 0
        %455 = vmatpush.msra.mxu0 0.0
        %456 = vmatpush.msra.mxu0 0.0
        %457 = vmatpush.msra.mxu0 0.0
        %458 = vmatpush.msra.mxu0 0.0
        %459 = vmatpush.msra.mxu0 0.0
        %460 = vmatpush.msra.mxu0 0.0
        %461 = vmatpush.msra.mxu0 0.0
        %462 = vmatpush.msra.mxu0 0.0
        %463 = vmatpush.msra.mxu0 0.0
        %464 = vmatpush.msra.mxu0 0.0
        %465 = vmatpush.msra.mxu0 0.0
        %466 = vmatpush.msra.mxu0 0.0
        %467 = vmatpush.msra.mxu0 %v451
        %468 = vmatpush.msra.mxu0 %v450
        %469 = vmatpush.msra.mxu0 %v449
        %470 = vmatpush.msra.mxu0 %v448
        %471 = vmatmul.f32.gmra.mxu0 %v453
        %v472 = vpop.f32.mrf.mxu0
        %v473 = vadd.f32 0.0, %v472
        %474 = vdwg.mxu0
        %v475 = vld [vmem:[#allocation11] sm:$0xff]
        %v476 = vld [vmem:[#allocation11 + $0x8] sm:$0xff]
        %v477 = vld [vmem:[#allocation11 + $0x10] sm:$0xff]
        %v478 = vld [vmem:[#allocation11 + $0x18] sm:$0xff]
        %479 = vmatpush.msra.mxu0 0.0
        %480 = vmatpush.msra.mxu0 0.0
        %481 = vmatpush.msra.mxu0 0.0
        %482 = vmatpush.msra.mxu0 0.0
        %483 = vmatpush.msra.mxu0 0.0
        %484 = vmatpush.msra.mxu0 0.0
        %485 = vmatpush.msra.mxu0 0.0
        %486 = vmatpush.msra.mxu0 0.0
        %487 = vmatpush.msra.mxu0 0.0
        %488 = vmatpush.msra.mxu0 0.0
        %489 = vmatpush.msra.mxu0 0.0
        %490 = vmatpush.msra.mxu0 0.0
        %491 = vmatpush.msra.mxu0 %v478
        %492 = vmatpush.msra.mxu0 %v477
        %493 = vmatpush.msra.mxu0 %v476
        %494 = vmatpush.msra.mxu0 %v475
        %495 = vmatmul.f32.gmra.mxu0 %v453
        %v496 = vpop.f32.mrf.mxu0
        %v497 = vadd.f32 0.0, %v496
        %498 = vdwg.mxu0
        %vm499 = vcmask 130048
        %v501 = vsel %vm499, %v446, 0
        %v504 = vsel %vm499, %v473, 0
        %506 = vmatpush.xpose.msra.mxu0 0.0
        %507 = vmatpush.xpose.msra.mxu0 0.0
        %508 = vmatpush.xpose.msra.mxu0 0.0
        %509 = vmatpush.xpose.msra.mxu0 0.0
        %510 = vmatpush.xpose.msra.mxu0 0.0
        %511 = vmatpush.xpose.msra.mxu0 0.0
        %512 = vmatpush.xpose.msra.mxu0 0.0
        %513 = vmatpush.xpose.msra.mxu0 0.0
        %514 = vmatpush.xpose.msra.mxu0 0.0
        %515 = vmatpush.xpose.msra.mxu0 0.0
        %516 = vmatpush.xpose.msra.mxu0 0.0
        %517 = vmatpush.xpose.msra.mxu0 0.0
        %518 = vmatpush.xpose.msra.mxu0 0.0
        %519 = vmatpush.xpose.msra.mxu0 0.0
        %520 = vmatpush.xpose.msra.mxu0 0.0
        %521 = vmatpush.xpose.msra.mxu0 %v504
        %522 = vmatmul.f32.gmra.mxu0 %v501
        %v523 = vpop.f32.mrf.mxu0
        %v524 = vadd.f32 0.0, %v523
        %525 = vdwg.mxu0
        %vm526 = vcmask 64512
        %v527 = vsel %vm526, %v524, -inf
        %528 = vmax.xlane.f32.xlu0 %v527
        %v529 = vpop.xlane.xlu0 %528
        %v530 = vsub.f32 %v524, %v529
        %v531 = vmul.f32 %v530, 1.442695
        %v532 = vpow.pop %v531
        %v533 = vsel %vm526, %v532, 0.0
        %534 = vadd.xlane.f32.xlu0 %v533
        %v535 = vpop.xlane.xlu0 %534
        %v536 = vrcp.pop %v535
        %v537 = vmul.f32 %v535, %v536
        %v538 = vsub.f32 1.0, %v537
        %v539 = vmul.f32 %v536, %v538
        %v540 = vadd.f32 %v536, %v539
        %vm541 = vweird.f32 %v535
        %vm542 = vweird.f32 %v536
        %vm543 = vmor %vm541, %vm542
        %v544 = vsel %vm543, %v536, %v540
        %v545 = vand.u32 2147483647, %v535
        %vm546 = vcmp.eq.f32.partialorder %v545, 8.507059e+37
        %v547 = vand.u32 %v535, 2147483648
        %v548 = vor.u32 1.1754944e-38, %v547
        %v549 = vsel %vm546, %v548, %v544
        %v550 = vmul.f32 %v532, %v549
        %v552 = vsel %vm526, %v550, 0
        %554 = vmatpush.msra.mxu0 0.0
        %555 = vmatpush.msra.mxu0 0.0
        %556 = vmatpush.msra.mxu0 0.0
        %557 = vmatpush.msra.mxu0 0.0
        %558 = vmatpush.msra.mxu0 0.0
        %559 = vmatpush.msra.mxu0 0.0
        %560 = vmatpush.msra.mxu0 0.0
        %561 = vmatpush.msra.mxu0 0.0
        %562 = vmatpush.msra.mxu0 0.0
        %563 = vmatpush.msra.mxu0 0.0
        %564 = vmatpush.msra.mxu0 0.0
        %565 = vmatpush.msra.mxu0 0.0
        %566 = vmatpush.msra.mxu0 0.0
        %567 = vmatpush.msra.mxu0 0.0
        %568 = vmatpush.msra.mxu0 0.0
        %569 = vmatpush.msra.mxu0 %v497
        %570 = vmatmul.f32.gmra.mxu0 %v552
        %v571 = vpop.f32.mrf.mxu0
        %v572 = vadd.f32 0.0, %v571
        %573 = vdwg.mxu0
        %574 = vst.msk [vmem:[#allocation2] sm:$0xff] %vm499, %v572
        %575 = vrot.lane.b32.xlu0 %v446, 112
        %v576 = vpop.permute.xlu0 %575
        %577 = vrot.lane.b32.xlu0 %v473, 112
        %v578 = vpop.permute.xlu0 %577
        %v579 = vsel %vm499, %v576, 0
        %v581 = vsel %vm499, %v578, 0
        %583 = vmatpush.xpose.msra.mxu0 0.0
        %584 = vmatpush.xpose.msra.mxu0 0.0
        %585 = vmatpush.xpose.msra.mxu0 0.0
        %586 = vmatpush.xpose.msra.mxu0 0.0
        %587 = vmatpush.xpose.msra.mxu0 0.0
        %588 = vmatpush.xpose.msra.mxu0 0.0
        %589 = vmatpush.xpose.msra.mxu0 0.0
        %590 = vmatpush.xpose.msra.mxu0 0.0
        %591 = vmatpush.xpose.msra.mxu0 0.0
        %592 = vmatpush.xpose.msra.mxu0 0.0
        %593 = vmatpush.xpose.msra.mxu0 0.0
        %594 = vmatpush.xpose.msra.mxu0 0.0
        %595 = vmatpush.xpose.msra.mxu0 0.0
        %596 = vmatpush.xpose.msra.mxu0 0.0
        %597 = vmatpush.xpose.msra.mxu0 0.0
        %598 = vmatpush.xpose.msra.mxu0 %v581
        %599 = vmatmul.f32.gmra.mxu0 %v579
        %v600 = vpop.f32.mrf.mxu0
        %v601 = vadd.f32 0.0, %v600
        %602 = vdwg.mxu0
        %v603 = vsel %vm526, %v601, -inf
        %604 = vmax.xlane.f32.xlu0 %v603
        %v605 = vpop.xlane.xlu0 %604
        %v606 = vsub.f32 %v601, %v605
        %v607 = vmul.f32 %v606, 1.442695
        %v608 = vpow.pop %v607
        %v609 = vsel %vm526, %v608, 0.0
        %610 = vadd.xlane.f32.xlu0 %v609
        %v611 = vpop.xlane.xlu0 %610
        %v612 = vrcp.pop %v611
        %v613 = vmul.f32 %v611, %v612
        %v614 = vsub.f32 1.0, %v613
        %v615 = vmul.f32 %v612, %v614
        %v616 = vadd.f32 %v612, %v615
        %vm617 = vweird.f32 %v611
        %vm618 = vweird.f32 %v612
        %vm619 = vmor %vm617, %vm618
        %v620 = vsel %vm619, %v612, %v616
        %v621 = vand.u32 2147483647, %v611
        %vm622 = vcmp.eq.f32.partialorder %v621, 8.507059e+37
        %v623 = vand.u32 %v611, 2147483648
        %v624 = vor.u32 1.1754944e-38, %v623
        %v625 = vsel %vm622, %v624, %v620
        %v626 = vmul.f32 %v608, %v625
        %628 = vrot.lane.b32.xlu0 %v497, 112
        %v629 = vpop.permute.xlu0 %628
        %v632 = vsel %vm526, %v626, 0
        %634 = vmatpush.msra.mxu0 0.0
        %635 = vmatpush.msra.mxu0 0.0
        %636 = vmatpush.msra.mxu0 0.0
        %637 = vmatpush.msra.mxu0 0.0
        %638 = vmatpush.msra.mxu0 0.0
        %639 = vmatpush.msra.mxu0 0.0
        %640 = vmatpush.msra.mxu0 0.0
        %641 = vmatpush.msra.mxu0 0.0
        %642 = vmatpush.msra.mxu0 0.0
        %643 = vmatpush.msra.mxu0 0.0
        %644 = vmatpush.msra.mxu0 0.0
        %645 = vmatpush.msra.mxu0 0.0
        %646 = vmatpush.msra.mxu0 0.0
        %647 = vmatpush.msra.mxu0 0.0
        %648 = vmatpush.msra.mxu0 0.0
        %649 = vmatpush.msra.mxu0 %v629
        %650 = vmatmul.f32.gmra.mxu0 %v632
        %v651 = vpop.f32.mrf.mxu0
        %v652 = vadd.f32 0.0, %v651
        %653 = vdwg.mxu0
        %655 = vrot.lane.b32.xlu0 %v652, 16
        %v656 = vpop.permute.xlu0 %655
        %vm658 = vcmask 261248
        %659 = vst.msk [vmem:[#allocation2] sm:$0xff] %vm658, %v656
        %v660 = vld [vmem:[#allocation2] sm:$0xff]
        %v661 = vld [vmem:[#allocation12] sm:$0xff]
        %v662 = vld [vmem:[#allocation12 + $0x8] sm:$0xff]
        %v663 = vld [vmem:[#allocation12 + $0x10] sm:$0xff]
        %v664 = vld [vmem:[#allocation12 + $0x18] sm:$0xff]
        %v665 = vld [vmem:[%s6] sm:$0x1]
        %v667 = vperm.slane %v665, 0
        %v670 = vsel %vm424, %v660, 0
        %672 = vmatpush.msra.mxu0 0.0
        %673 = vmatpush.msra.mxu0 0.0
        %674 = vmatpush.msra.mxu0 0.0
        %675 = vmatpush.msra.mxu0 0.0
        %676 = vmatpush.msra.mxu0 0.0
        %677 = vmatpush.msra.mxu0 0.0
        %678 = vmatpush.msra.mxu0 0.0
        %679 = vmatpush.msra.mxu0 0.0
        %680 = vmatpush.msra.mxu0 0.0
        %681 = vmatpush.msra.mxu0 0.0
        %682 = vmatpush.msra.mxu0 0.0
        %683 = vmatpush.msra.mxu0 0.0
        %684 = vmatpush.msra.mxu0 %v664
        %685 = vmatpush.msra.mxu0 %v663
        %686 = vmatpush.msra.mxu0 %v662
        %687 = vmatpush.msra.mxu0 %v661
        %688 = vmatmul.f32.gmra.mxu0 %v670
        %v689 = vpop.f32.mrf.mxu0
        %v690 = vadd.f32 %v667, %v689
        %691 = vdwg.mxu0
        %692 = vst.msk [vmem:[%s417] sm:$0xff] %vm424, %v690
        %s693 = sand.u32 %s210, 1
        %s694 = scalar_lea.sflag [#allocation5], %s693
        %s695 = sand.u32 %s210, 1
        %s696 = smul.addr %s695, 8
        %s697 = scalar_lea.vmem [#allocation14], %s696
        // Predicated region
        $region73: #{tpu_custom_call.1} parent=47 // pred_check
          %p698 = pneg %p220
        $region74: #{tpu_custom_call.1} parent=47 // pred_check_branch
          %700 = sbr.rel (%p698) target = $region76
        $region75: #{tpu_custom_call.1} parent=47 // pred_region
          %702 = vsyncadd %s694, 0
          %s703 = sadd.s32 %s34, %s33
          %s704 = smul.addr %s703, 8
          %s705 = scalar_lea.hbm %s7, %s704
          %s707 = sshll.u32 %s697, 4
          %s708 = int_to_ptr.vmem [resolvable:$true] %s707
          %s709 = sshll.u32 %s705, 4
          %s710 = int_to_ptr.hbm [resolvable:$true] %s709
          %712 = dma.vmem_to_hbm [thread:$0]  %s708, 128, %s710, %s694
        $region76: #{tpu_custom_call.1} parent=47 // pred_fallthru
          _
      $region48: #{tpu_custom_call.1} parent=5 // pred_fallthru
        _
      %p713 = scmp.le.s32.totalorder 2, %s24
      // Predicated region
      $region77: #{tpu_custom_call.1} parent=5 // pred_check
        %p714 = pneg %p713
      $region78: #{tpu_custom_call.1} parent=5 // pred_check_branch
        %716 = sbr.rel (%p714) target = $region80
      $region79: #{tpu_custom_call.1} parent=5 // pred_region
        %s717 = ssub.s32 %s24, 2
        // Predicated region
        $region81: #{tpu_custom_call.1} parent=79 // pred_check
          %p718 = pneg %p226
        $region82: #{tpu_custom_call.1} parent=79 // pred_check_branch
          %720 = sbr.rel (%p718) target = $region84
        $region83: #{tpu_custom_call.1} parent=79 // pred_region
          %s721 = sand.u32 %s211, 1
          %s722 = scalar_lea.sflag [#allocation5], %s721
          %s723 = sand.u32 %s211, 1
          %s724 = smul.addr %s723, 8
          %s725 = scalar_lea.vmem [#allocation14], %s724
          %727 = dma.done %s722, 128
        $region84: #{tpu_custom_call.1} parent=79 // pred_fallthru
          _
      $region80: #{tpu_custom_call.1} parent=5 // pred_fallthru
        _
    $region6: #{tpu_custom_call.1} parent=1 // loop_footer
      %s28 = sadd.s32 1, %s24
    $region7: #{tpu_custom_call.1} parent=1 // loop_footer_branch
      %23 = sbr.rel target = $region3
    $region8: #{tpu_custom_call.1} parent=1 // loop_exit
      _
    %728 = vsyncpa [#allocation4], 1
    %s729 = scalar_lea.sflag [#allocation4], 1
    %730 = vsyncpa %s729, 1
    %731 = vsyncpa [#allocation7], 1
    %s732 = scalar_lea.sflag [#allocation7], 1
    %733 = vsyncpa %s732, 1
    %734 = vsyncpa [#allocation10], 1
    %735 = vsyncpa [#allocation13], 1
    %736 = vsyncpa [#allocation5], 1
    %s737 = scalar_lea.sflag [#allocation5], 1
    %738 = vsyncpa %s737, 1

</llo_original>
